<compile_context>
chip_gen: v7x
topology: tpu7x:2x2x1
jax: 0.10.0
libtpu: 0.0.40
codegen_flags: <defaults>
</compile_context>

<pallas_src>
import jax
import jax.numpy as jnp
from jax.experimental import pallas as pl
from jax.experimental.pallas import tpu as pltpu


M_SUB = 8     # sublane tile
LANES = 128   # lane tile


def _make_addmm_kernel(K, M):
    def _kernel(x_ref, p_ref, o_ref):
        # x_ref: (1, M, N) block of the batched additive operand.
        # p_ref: (K*M + 8, N) packed params slab:
        #   rows [k*M, (k+1)*M) -> w[:, k] pre-broadcast across all lanes
        #   row  [K*M + k]      -> b[k, :]
        p = p_ref[...]
        acc = x_ref[0].astype(jnp.float32)                 # (M, N)
        for k in range(K):                                 # static unroll (K == 3)
            wk = p[k * M:(k + 1) * M, :]                   # (M, N) lane-resident
            bk = p[K * M + k:K * M + k + 1, :]             # (1, N) sublane bcast
            acc = acc + wk * bk                            # pure-VPU FMA
        o_ref[0] = acc.astype(o_ref.dtype)
    return _kernel


def addmm_cat(x, w, b):
    """v = x + w @ b (optionally batched over a leading axis of x).
    torch.cat([v], dim) of a single tensor is the identity, so it is elided."""
    squeeze = (x.ndim == 2)
    xb = x[None] if squeeze else x
    B, M, N = xb.shape
    K, N2 = b.shape
    assert w.shape == (M, K) and N2 == N and x.dtype == jnp.float32
    assert M == M_SUB and N % LANES == 0

    # Pack every parameter into one lane-dense f32 slab (single shared DMA):
    #   w columns pre-broadcast along lanes (avoids in-kernel lane-broadcast
    #   relayouts), b padded from (K, N) to (8, N) to keep sublanes % 8 == 0.
    w_bcast = jnp.broadcast_to(
        jnp.transpose(w).astype(jnp.float32)[:, :, None], (K, M, N)
    ).reshape(K * M, N)
    b_pad = jnp.zeros((M_SUB, N), jnp.float32).at[:K, :].set(b.astype(jnp.float32))
    params = jnp.concatenate([w_bcast, b_pad], axis=0)      # (K*M + 8, N)

    out = pl.pallas_call(
        _make_addmm_kernel(K, M),
        out_shape=jax.ShapeDtypeStruct((B, M, N), x.dtype),
        grid=(B,),
        in_specs=[
            pl.BlockSpec((1, M, N), lambda i: (i, 0, 0)),
            pl.BlockSpec((K * M + M_SUB, N), lambda i: (0, 0)),
        ],
        out_specs=pl.BlockSpec((1, M, N), lambda i: (i, 0, 0)),
        # Result shares x's HBM buffer.
        input_output_aliases={0: 0},
        # Batch axis is embarrassingly parallel -> shard across TCs on v7x.
        compiler_params=pltpu.CompilerParams(
            dimension_semantics=("parallel",)),
    )(xb, params)
    return out[0] if squeeze else out


if __name__ == "__main__":
    key = jax.random.PRNGKey(0)
    k_x, k_w, k_b = jax.random.split(key, 3)

    M, K, N = 8, 3, 128  # out_channels=8, in_channels=3 from Conv2d(3, 8, 1)

    # Deterministic "conv" parameters: weight (8,3,1,1) -> squeeze to (8,3).
    conv_weight = jax.random.normal(k_w, (M, K, 1, 1), dtype=jnp.float32)
    w = conv_weight.reshape(M, K)
    # mat2: deterministic (K, N) matrix (conv bias shape (8,) is unusable here).
    b = jax.random.normal(k_b, (K, N), dtype=jnp.float32)

    x1 = jax.random.normal(k_x, (M, N), dtype=jnp.float32)

    # Reference computed before the kernel call (kernel output aliases the
    # batched copy of x1 via input_output_aliases).
    ref = x1 + w @ b

    out = addmm_cat(x1, w, b)
    jax.block_until_ready(out)

    assert out.shape == (M, N)
    assert jnp.allclose(out, ref, atol=1e-5, rtol=1e-5)

    print("KERNEL_OK")
</pallas_src>

<mosaic_0001>
module attributes {stable_mosaic.version = 11 : i64} {
  func.func @_kernel(%arg0: i32, %arg1: memref<1x8x128xf32, #tpu.memory_space<vmem>>, %arg2: memref<32x128xf32, #tpu.memory_space<vmem>>, %arg3: memref<1x8x128xf32, #tpu.memory_space<vmem>>) attributes {dimension_semantics = [#tpu.dimension_semantics<parallel>], iteration_bounds = array<i64: 1>, scalar_prefetch = 0 : i64, scratch_operands = 0 : i64, tpu.core_type = #tpu.core_type<tc>, window_params = [{transform_indices = @transform_0, window_bounds = array<i64: 1, 8, 128>}, {pipeline_mode = #tpu.pipeline_mode<synchronous>, transform_indices = @transform_1, window_bounds = array<i64: 32, 128>}, {transform_indices = @transform_2, window_bounds = array<i64: 1, 8, 128>}]} {
    %c0 = arith.constant 0 : index
    %c0_0 = arith.constant 0 : index
    %0 = vector.load %arg2[%c0, %c0_0] : memref<32x128xf32, #tpu.memory_space<vmem>>, vector<32x128xf32>
    %c0_1 = arith.constant 0 : index
    %c0_2 = arith.constant 0 : index
    %c0_3 = arith.constant 0 : index
    %1 = vector.load %arg1[%c0_1, %c0_2, %c0_3] : memref<1x8x128xf32, #tpu.memory_space<vmem>>, vector<1x8x128xf32>
    %2 = vector.shape_cast %1 : vector<1x8x128xf32> to vector<8x128xf32>
    %3 = vector.extract_strided_slice %0 {offsets = [0, 0], sizes = [8, 128], strides = [1, 1]} : vector<32x128xf32> to vector<8x128xf32>
    %4 = vector.extract_strided_slice %0 {offsets = [24, 0], sizes = [1, 128], strides = [1, 1]} : vector<32x128xf32> to vector<1x128xf32>
    %5 = vector.broadcast %4 : vector<1x128xf32> to vector<8x128xf32>
    %6 = arith.mulf %3, %5 : vector<8x128xf32>
    %7 = arith.addf %2, %6 : vector<8x128xf32>
    %8 = vector.extract_strided_slice %0 {offsets = [8, 0], sizes = [8, 128], strides = [1, 1]} : vector<32x128xf32> to vector<8x128xf32>
    %9 = vector.extract_strided_slice %0 {offsets = [25, 0], sizes = [1, 128], strides = [1, 1]} : vector<32x128xf32> to vector<1x128xf32>
    %10 = vector.broadcast %9 : vector<1x128xf32> to vector<8x128xf32>
    %11 = arith.mulf %8, %10 : vector<8x128xf32>
    %12 = arith.addf %7, %11 : vector<8x128xf32>
    %13 = vector.extract_strided_slice %0 {offsets = [16, 0], sizes = [8, 128], strides = [1, 1]} : vector<32x128xf32> to vector<8x128xf32>
    %14 = vector.extract_strided_slice %0 {offsets = [26, 0], sizes = [1, 128], strides = [1, 1]} : vector<32x128xf32> to vector<1x128xf32>
    %15 = vector.broadcast %14 : vector<1x128xf32> to vector<8x128xf32>
    %16 = arith.mulf %13, %15 : vector<8x128xf32>
    %17 = arith.addf %12, %16 : vector<8x128xf32>
    %c0_4 = arith.constant 0 : index
    %c0_5 = arith.constant 0 : index
    %c0_6 = arith.constant 0 : index
    %18 = vector.load %arg3[%c0_4, %c0_5, %c0_6] : memref<1x8x128xf32, #tpu.memory_space<vmem>>, vector<1x8x128xf32>
    %19 = vector.shape_cast %18 : vector<1x8x128xf32> to vector<8x128xf32>
    %20 = vector.shape_cast %17 : vector<8x128xf32> to vector<1x8x128xf32>
    tpu.vector_store %arg3[%c0_4, %c0_5, %c0_6], %20 {strides = array<i32>} : memref<1x8x128xf32, #tpu.memory_space<vmem>>, vector<1x8x128xf32>,
    return
  }
  func.func @transform_0(%arg0: i32) -> (i32, i32, i32) {
    %c0_i32 = arith.constant 0 : i32
    %c0_i32_0 = arith.constant 0 : i32
    %c0_i32_1 = arith.constant 0 : i32
    return %arg0, %c0_i32, %c0_i32_0 : i32, i32, i32
  }
  func.func @transform_1(%arg0: i32) -> (i32, i32) {
    %c0_i32 = arith.constant 0 : i32
    %c0_i32_0 = arith.constant 0 : i32
    %c0_i32_1 = arith.constant 0 : i32
    return %c0_i32, %c0_i32_0 : i32, i32
  }
  func.func @transform_2(%arg0: i32) -> (i32, i32, i32) {
    %c0_i32 = arith.constant 0 : i32
    %c0_i32_0 = arith.constant 0 : i32
    %c0_i32_1 = arith.constant 0 : i32
    return %arg0, %c0_i32, %c0_i32_0 : i32, i32, i32
  }
}

</mosaic_0001>

<llo_original>
// kernel: tpu_custom_call.1
$region0: #{tpu_custom_call.1}
  #allocation0 [shape = 'u32[]', space=smem, size = 0x4, offset = 0x4, fixed_abs, tag = 'smem constant byte address 0x4 - core index']
  #allocation1 [shape = 'u32[144,128]{1,0:T(1,128)}', space=vmem, size = 0x12000, scoped, tag = 'internal scratch']
  %s0 = inlined_call_operand.hbm [shape: f32[1,8,128], index: 0, kind: input, shape index: {}, may-alias: {0,2}]
  %s1 = inlined_call_operand.hbm [shape: f32[32,128], index: 1, kind: input, shape index: {}]
  %s2 = inlined_call_operand.hbm [shape: f32[1,8,128], index: 2, kind: output, shape index: {}, may-alias: {0,2}]
  %s3 = sld [smem:[#allocation0]]
  $region26: #{tpu_custom_call.1} parent=0
    _
  %s5 = ssub.s32 1, %s3
  %s6 = scalar_select 0, %s5, %s3
  $region1: #{tpu_custom_call.1} parent=0
    #allocation2 [shape = 'u8[4096]{0}', space=vmem, size = 0x1000, scoped, tag = 'input window, operand 0, single buffered']
    #allocation3 [shape = 's32[1]{0}', space=sflag, size = 0x4, scoped, tag = 'scoped memory for tpu_custom_call.1']
    #allocation4 [shape = 's32[1]{0}', space=sflag, size = 0x4, scoped, tag = 'scoped memory for tpu_custom_call.1']
    #allocation5 [shape = 'u8[16384]{0}', space=vmem, size = 0x4000, scoped, tag = 'input window, operand 1, single buffered']
    #allocation6 [shape = 's32[1]{0}', space=sflag, size = 0x4, scoped, tag = 'scoped memory for tpu_custom_call.1']
    #allocation7 [shape = 'u8[4096]{0}', space=vmem, size = 0x1000, scoped, tag = 'output window, operand 0, single buffered']
    %7 = vsyncpa [#allocation3], 0
    %8 = vsyncpa [#allocation6], 0
    %9 = vsyncpa [#allocation4], 0
    // Predicated region
    $region2: #{tpu_custom_call.1} parent=1 // pred_check
      _
    $region3: #{tpu_custom_call.1} parent=1 // pred_check_branch
      %11 = sbr.rel (0) target = $region5
    $region4: #{tpu_custom_call.1} parent=1 // pred_region
      %s13 = ssub.s32 128, 128
      %14 = vsyncadd [#allocation3], %s13
      %s16 = sshll.u32 [#allocation2], 4
      %s17 = int_to_ptr.vmem [resolvable:$true] %s16
      %19 = dma.hbm_to_vmem [thread:$0]  %s0, 128, %s17, [#allocation3]
    $region5: #{tpu_custom_call.1} parent=1 // pred_fallthru
      _
    // Predicated region
    $region6: #{tpu_custom_call.1} parent=1 // pred_check
      _
    $region7: #{tpu_custom_call.1} parent=1 // pred_check_branch
      %21 = sbr.rel (0) target = $region9
    $region8: #{tpu_custom_call.1} parent=1 // pred_region
      %s23 = ssub.s32 512, 512
      %24 = vsyncadd [#allocation6], %s23
      %s25 = sshll.u32 [#allocation5], 4
      %s26 = int_to_ptr.vmem [resolvable:$true] %s25
      %31 = dma.hbm_to_vmem [thread:$0]  %s1, 512, %s26, [#allocation6], 128, 128, 8
    $region9: #{tpu_custom_call.1} parent=1 // pred_fallthru
      _
    // Predicated region
    $region10: #{tpu_custom_call.1} parent=1 // pred_check
      _
    $region11: #{tpu_custom_call.1} parent=1 // pred_check_branch
      %33 = sbr.rel (0) target = $region13
    $region12: #{tpu_custom_call.1} parent=1 // pred_region
      %34 = dma.done [#allocation3], 128
    $region13: #{tpu_custom_call.1} parent=1 // pred_fallthru
      _
    // Predicated region
    $region14: #{tpu_custom_call.1} parent=1 // pred_check
      _
    $region15: #{tpu_custom_call.1} parent=1 // pred_check_branch
      %36 = sbr.rel (0) target = $region17
    $region16: #{tpu_custom_call.1} parent=1 // pred_region
      %37 = dma.done [#allocation6], 512
    $region17: #{tpu_custom_call.1} parent=1 // pred_fallthru
      _
    %v38 = vld [vmem:[#allocation5] sm:$0xff]
    %v39 = vld [vmem:[#allocation5 + $0x8] sm:$0xff]
    %v40 = vld [vmem:[#allocation5 + $0x10] sm:$0xff]
    %v41 = vld [vmem:[#allocation5 + $0x18] sm:$0xff]
    %v42 = vld [vmem:[#allocation2] sm:$0xff]
    %v43 = vlaneseq
    %v44 = vshrl.u32 %v43, 7
    %v45 = vsub.s32 0, %v44
    %v46 = vrot.slane %v41, %v45
    %v47 = vmul.f32 %v38, %v46
    %v48 = vadd.f32 %v42, %v47
    %v49 = vlaneseq
    %v50 = vshrl.u32 %v49, 7
    %v51 = vsub.s32 1, %v50
    %v52 = vrot.slane %v41, %v51
    %v53 = vmul.f32 %v39, %v52
    %v54 = vadd.f32 %v48, %v53
    %v55 = vlaneseq
    %v56 = vshrl.u32 %v55, 7
    %v57 = vsub.s32 2, %v56
    %v58 = vrot.slane %v41, %v57
    %v59 = vmul.f32 %v40, %v58
    %v60 = vadd.f32 %v54, %v59
    %61 = vst [vmem:[#allocation7] sm:$0xff] %v60
    // Predicated region
    $region18: #{tpu_custom_call.1} parent=1 // pred_check
      _
    $region19: #{tpu_custom_call.1} parent=1 // pred_check_branch
      %63 = sbr.rel (0) target = $region21
    $region20: #{tpu_custom_call.1} parent=1 // pred_region
      %s65 = ssub.s32 128, 128
      %66 = vsyncadd [#allocation4], %s65
      %s68 = sshll.u32 [#allocation7], 4
      %s69 = int_to_ptr.vmem [resolvable:$true] %s68
      %71 = dma.vmem_to_hbm [thread:$0]  %s69, 128, %s2, [#allocation4]
    $region21: #{tpu_custom_call.1} parent=1 // pred_fallthru
      _
    // Predicated region
    $region22: #{tpu_custom_call.1} parent=1 // pred_check
      _
    $region23: #{tpu_custom_call.1} parent=1 // pred_check_branch
      %73 = sbr.rel (0) target = $region25
    $region24: #{tpu_custom_call.1} parent=1 // pred_region
      %74 = dma.done [#allocation4], 128
    $region25: #{tpu_custom_call.1} parent=1 // pred_fallthru
      _
    %75 = vsyncpa [#allocation3], 1
    %76 = vsyncpa [#allocation6], 1
    %77 = vsyncpa [#allocation4], 1

</llo_original>
